<compile_context>
chip_gen: v7x
topology: tpu7x:2x2x1
jax: 0.10.0
libtpu: 0.0.40
codegen_flags: <defaults>
</compile_context>

<pallas_src>
import numpy as np
import jax
import jax.numpy as jnp
from jax import lax
from jax.experimental import pallas as pl
from jax.experimental.pallas import tpu as pltpu


def decoder_kernel(x_ref, wih_ref, whh_ref, b_ref, hc0_ref, lw_ref, lb_ref,
                   out_ref, hc_ref):
    """Full LSTM recurrence + final linear projection in one kernel."""
    T = x_ref.shape[0]
    H = hc0_ref.shape[1]

    # Hoisted input projection with fused bias: one lane-dense (T, 4H) matmul
    # off the serial chain.  Bias is folded here so the loop has no broadcasts.
    xW = jnp.dot(x_ref[...], wih_ref[...],
                 preferred_element_type=jnp.float32) + b_ref[...]   # (T, 4H)
    whh = whh_ref[...]                                              # (H, 4H)

    h = hc0_ref[0:1, :]                                             # (1, H)
    c = hc0_ref[1:2, :]                                             # (1, H)

    # Fully unrolled serial recurrence: exactly one MXU push per timestep and
    # three EUP ops per timestep (sigmoid over the full gate vreg, tanh(g),
    # tanh(c)).
    for t in range(T):
        pre = xW[t:t + 1, :] + jnp.dot(
            h, whh, preferred_element_type=jnp.float32)             # (1, 4H)
        sig = jax.nn.sigmoid(pre)                                   # i, f, -, o
        i_g = sig[:, 0 * H:1 * H]
        f_g = sig[:, 1 * H:2 * H]
        o_g = sig[:, 3 * H:4 * H]
        g_g = jnp.tanh(pre[:, 2 * H:3 * H])
        c = f_g * c + i_g * g_g
        h = o_g * jnp.tanh(c)

    # Packed state output: one (2, H) array instead of two (1, H) arrays.
    hc_ref[0:1, :] = h
    hc_ref[1:2, :] = c
    # linear(output)[-1].unsqueeze(0): the last LSTM output row equals h_T.
    out_ref[...] = jnp.dot(h, lw_ref[...],
                           preferred_element_type=jnp.float32) + lb_ref[...]


def decoder_forward(x, fused_params, h_n, c_n):
    """x: (1, T, In) float32 (batch_first, batch==1).  Returns (out, h_n, c_n).

    TODO(synk): if more than one sequence is ever fed, batch the recurrence on
    (B, H) state instead of calling this kernel per sequence.
    """
    wih_f, whh_f, b_f, lw, lb = fused_params
    T, In = x.shape[1], x.shape[2]
    H = whh_f.shape[0]
    Out = lw.shape[1]

    x2d = x.reshape(T, In)               # network_input.view(...) + squeeze batch
    hc0 = jnp.concatenate([h_n.reshape(1, H), c_n.reshape(1, H)], axis=0)

    vspec = pl.BlockSpec(memory_space=pltpu.MemorySpace.VMEM)
    cost = pl.CostEstimate(
        flops=2 * T * (In + H) * 4 * H + 2 * H * Out,
        transcendentals=3 * T * 4 * H,
        bytes_accessed=4 * (T * In + In * 4 * H + H * 4 * H + 4 * H
                            + 2 * H + H * Out + 2 * Out + 2 * H),
    )

    out, hc = pl.pallas_call(
        decoder_kernel,
        out_shape=(jax.ShapeDtypeStruct((1, Out), jnp.float32),
                   jax.ShapeDtypeStruct((2, H), jnp.float32)),
        in_specs=[vspec] * 7,
        out_specs=(vspec, vspec),
        cost_estimate=cost,
    )(x2d, wih_f, whh_f, b_f, hc0, lw, lb)

    h_new = hc[0:1, :].reshape(1, 1, H)
    c_new = hc[1:2, :].reshape(1, 1, H)
    return out, h_new, c_new


def fuse_lstm_params(wih, whh, b, lw, lb):
    """Gate-major (4, In, H)/(4, H, H)/(4, H) -> fused (In, 4H)/(H, 4H)/(1, 4H)."""
    H = wih.shape[2]
    wih_f = jnp.concatenate([wih[k] for k in range(4)], axis=1)   # (In, 4H)
    whh_f = jnp.concatenate([whh[k] for k in range(4)], axis=1)   # (H, 4H)
    b_f = b.reshape(1, 4 * H)                                     # (1, 4H)
    return (wih_f, whh_f, b_f, lw, lb)


def reference_forward(x, params, h_n, c_n):
    """Pure-JAX reference matching torch.nn.LSTM + nn.Linear semantics."""
    wih, whh, b, lw, lb = params
    T, In = x.shape[1], x.shape[2]
    H = wih.shape[2]
    h = h_n.reshape(1, H)
    c = c_n.reshape(1, H)

    def step(carry, x_t):
        h, c = carry
        x_t = x_t[None, :]
        pre = [x_t @ wih[k] + h @ whh[k] + b[k][None, :] for k in range(4)]
        i_g = jax.nn.sigmoid(pre[0])
        f_g = jax.nn.sigmoid(pre[1])
        g_g = jnp.tanh(pre[2])
        o_g = jax.nn.sigmoid(pre[3])
        c_new = f_g * c + i_g * g_g
        h_new = o_g * jnp.tanh(c_new)
        return (h_new, c_new), h_new

    (h_T, c_T), _ = lax.scan(step, (h, c), x.reshape(T, In))
    out = h_T @ lw + lb
    return out, h_T.reshape(1, 1, H), c_T.reshape(1, 1, H)


if __name__ == "__main__":
    # Small shapes implied by the module: batch=1 (state is (1,1,H)), seq=8.
    In, H, Out, T = 4, 32, 4, 8

    key = jax.random.PRNGKey(0)
    ks = jax.random.split(key, 8)
    bound = 1.0 / np.sqrt(H)   # PyTorch default LSTM/Linear init range

    # Gate order (i, f, g, o), stored gate-major and pre-transposed for x @ W.
    wih = jax.random.uniform(ks[0], (4, In, H), jnp.float32, -bound, bound)
    whh = jax.random.uniform(ks[1], (4, H, H), jnp.float32, -bound, bound)
    b_ih = jax.random.uniform(ks[2], (4, H), jnp.float32, -bound, bound)
    b_hh = jax.random.uniform(ks[3], (4, H), jnp.float32, -bound, bound)
    b = b_ih + b_hh
    lw = jax.random.uniform(ks[4], (H, Out), jnp.float32, -bound, bound)
    lb = jax.random.uniform(ks[5], (1, Out), jnp.float32, -bound, bound)
    params = (wih, whh, b, lw, lb)
    fused_params = fuse_lstm_params(wih, whh, b, lw, lb)

    x = jax.random.normal(ks[6], (1, T, In), jnp.float32)
    h_n = jnp.zeros((1, 1, H), jnp.float32)   # stateful init, as in __init__
    c_n = jnp.zeros((1, 1, H), jnp.float32)

    out, h_new, c_new = decoder_forward(x, fused_params, h_n, c_n)
    jax.block_until_ready((out, h_new, c_new))

    # Second (stateful) call, feeding back the new states like the torch module.
    out2, h2, c2 = decoder_forward(x, fused_params, h_new, c_new)
    jax.block_until_ready((out2, h2, c2))

    ref_out, ref_h, ref_c = reference_forward(x, params, h_n, c_n)
    ref_out2, _, _ = reference_forward(x, params, ref_h, ref_c)
    np.testing.assert_allclose(np.asarray(out), np.asarray(ref_out), rtol=1e-5, atol=1e-5)
    np.testing.assert_allclose(np.asarray(h_new), np.asarray(ref_h), rtol=1e-5, atol=1e-5)
    np.testing.assert_allclose(np.asarray(c_new), np.asarray(ref_c), rtol=1e-5, atol=1e-5)
    np.testing.assert_allclose(np.asarray(out2), np.asarray(ref_out2), rtol=1e-5, atol=1e-5)
    assert out.shape == (1, Out)

    print("KERNEL_OK")
</pallas_src>

<mosaic_0001>
module attributes {stable_mosaic.version = 11 : i64} {
  func.func @decoder_kernel(%arg0: memref<8x4xf32, #tpu.memory_space<vmem>>, %arg1: memref<4x128xf32, #tpu.memory_space<vmem>>, %arg2: memref<32x128xf32, #tpu.memory_space<vmem>>, %arg3: memref<1x128xf32, #tpu.memory_space<vmem>>, %arg4: memref<2x32xf32, #tpu.memory_space<vmem>>, %arg5: memref<32x4xf32, #tpu.memory_space<vmem>>, %arg6: memref<1x4xf32, #tpu.memory_space<vmem>>, %arg7: memref<1x4xf32, #tpu.memory_space<vmem>>, %arg8: memref<2x32xf32, #tpu.memory_space<vmem>>) attributes {dimension_semantics = [], scalar_prefetch = 0 : i64, scratch_operands = 0 : i64, tpu.core_type = #tpu.core_type<tc>} {
    %c0 = arith.constant 0 : index
    %c0_0 = arith.constant 0 : index
    %0 = vector.load %arg0[%c0, %c0_0] : memref<8x4xf32, #tpu.memory_space<vmem>>, vector<8x4xf32>
    %c0_1 = arith.constant 0 : index
    %c0_2 = arith.constant 0 : index
    %1 = vector.load %arg1[%c0_1, %c0_2] : memref<4x128xf32, #tpu.memory_space<vmem>>, vector<4x128xf32>
    %cst = arith.constant dense<0.000000e+00> : vector<8x128xf32>
    %2 = tpu.matmul %0, %1, %cst {dimension_numbers = #tpu.dot_dimension_numbers<[1], [0], [0], [1], [0, 0, 1, 1], [], []>} : vector<8x4xf32>, vector<4x128xf32>, vector<8x128xf32> -> vector<8x128xf32>
    %c0_3 = arith.constant 0 : index
    %c0_4 = arith.constant 0 : index
    %3 = vector.load %arg3[%c0_3, %c0_4] : memref<1x128xf32, #tpu.memory_space<vmem>>, vector<1x128xf32>
    %4 = vector.broadcast %3 : vector<1x128xf32> to vector<8x128xf32>
    %5 = arith.addf %2, %4 : vector<8x128xf32>
    %c0_5 = arith.constant 0 : index
    %c0_6 = arith.constant 0 : index
    %6 = vector.load %arg2[%c0_5, %c0_6] : memref<32x128xf32, #tpu.memory_space<vmem>>, vector<32x128xf32>
    %c0_7 = arith.constant 0 : index
    %c0_8 = arith.constant 0 : index
    %7 = vector.load %arg4[%c0_7, %c0_8] : memref<2x32xf32, #tpu.memory_space<vmem>>, vector<1x32xf32>
    %c1 = arith.constant 1 : index
    %c0_9 = arith.constant 0 : index
    %8 = vector.load %arg4[%c1, %c0_9] : memref<2x32xf32, #tpu.memory_space<vmem>>, vector<1x32xf32>
    %9 = vector.extract_strided_slice %5 {offsets = [0, 0], sizes = [1, 128], strides = [1, 1]} : vector<8x128xf32> to vector<1x128xf32>
    %cst_10 = arith.constant dense<0.000000e+00> : vector<1x128xf32>
    %10 = tpu.matmul %7, %6, %cst_10 {dimension_numbers = #tpu.dot_dimension_numbers<[1], [0], [0], [1], [0, 0, 1, 1], [], []>} : vector<1x32xf32>, vector<32x128xf32>, vector<1x128xf32> -> vector<1x128xf32>
    %11 = arith.addf %9, %10 : vector<1x128xf32>
    %12 = arith.negf %11 : vector<1x128xf32>
    %13 = math.exp %12 : vector<1x128xf32>
    %cst_11 = arith.constant 1.000000e+00 : f32
    %14 = vector.broadcast %cst_11 : f32 to vector<1x128xf32>
    %15 = arith.addf %14, %13 : vector<1x128xf32>
    %16 = arith.divf %14, %15 : vector<1x128xf32>
    %17 = vector.extract_strided_slice %16 {offsets = [0, 0], sizes = [1, 32], strides = [1, 1]} : vector<1x128xf32> to vector<1x32xf32>
    %18 = vector.extract_strided_slice %16 {offsets = [0, 32], sizes = [1, 32], strides = [1, 1]} : vector<1x128xf32> to vector<1x32xf32>
    %19 = vector.extract_strided_slice %16 {offsets = [0, 96], sizes = [1, 32], strides = [1, 1]} : vector<1x128xf32> to vector<1x32xf32>
    %20 = vector.extract_strided_slice %11 {offsets = [0, 64], sizes = [1, 32], strides = [1, 1]} : vector<1x128xf32> to vector<1x32xf32>
    %21 = math.tanh %20 : vector<1x32xf32>
    %22 = arith.mulf %18, %8 : vector<1x32xf32>
    %23 = arith.mulf %17, %21 : vector<1x32xf32>
    %24 = arith.addf %22, %23 : vector<1x32xf32>
    %25 = math.tanh %24 : vector<1x32xf32>
    %26 = arith.mulf %19, %25 : vector<1x32xf32>
    %27 = vector.extract_strided_slice %5 {offsets = [1, 0], sizes = [1, 128], strides = [1, 1]} : vector<8x128xf32> to vector<1x128xf32>
    %cst_12 = arith.constant dense<0.000000e+00> : vector<1x128xf32>
    %28 = tpu.matmul %26, %6, %cst_12 {dimension_numbers = #tpu.dot_dimension_numbers<[1], [0], [0], [1], [0, 0, 1, 1], [], []>} : vector<1x32xf32>, vector<32x128xf32>, vector<1x128xf32> -> vector<1x128xf32>
    %29 = arith.addf %27, %28 : vector<1x128xf32>
    %30 = arith.negf %29 : vector<1x128xf32>
    %31 = math.exp %30 : vector<1x128xf32>
    %cst_13 = arith.constant 1.000000e+00 : f32
    %32 = vector.broadcast %cst_13 : f32 to vector<1x128xf32>
    %33 = arith.addf %32, %31 : vector<1x128xf32>
    %34 = arith.divf %32, %33 : vector<1x128xf32>
    %35 = vector.extract_strided_slice %34 {offsets = [0, 0], sizes = [1, 32], strides = [1, 1]} : vector<1x128xf32> to vector<1x32xf32>
    %36 = vector.extract_strided_slice %34 {offsets = [0, 32], sizes = [1, 32], strides = [1, 1]} : vector<1x128xf32> to vector<1x32xf32>
    %37 = vector.extract_strided_slice %34 {offsets = [0, 96], sizes = [1, 32], strides = [1, 1]} : vector<1x128xf32> to vector<1x32xf32>
    %38 = vector.extract_strided_slice %29 {offsets = [0, 64], sizes = [1, 32], strides = [1, 1]} : vector<1x128xf32> to vector<1x32xf32>
    %39 = math.tanh %38 : vector<1x32xf32>
    %40 = arith.mulf %36, %24 : vector<1x32xf32>
    %41 = arith.mulf %35, %39 : vector<1x32xf32>
    %42 = arith.addf %40, %41 : vector<1x32xf32>
    %43 = math.tanh %42 : vector<1x32xf32>
    %44 = arith.mulf %37, %43 : vector<1x32xf32>
    %45 = vector.extract_strided_slice %5 {offsets = [2, 0], sizes = [1, 128], strides = [1, 1]} : vector<8x128xf32> to vector<1x128xf32>
    %cst_14 = arith.constant dense<0.000000e+00> : vector<1x128xf32>
    %46 = tpu.matmul %44, %6, %cst_14 {dimension_numbers = #tpu.dot_dimension_numbers<[1], [0], [0], [1], [0, 0, 1, 1], [], []>} : vector<1x32xf32>, vector<32x128xf32>, vector<1x128xf32> -> vector<1x128xf32>
    %47 = arith.addf %45, %46 : vector<1x128xf32>
    %48 = arith.negf %47 : vector<1x128xf32>
    %49 = math.exp %48 : vector<1x128xf32>
    %cst_15 = arith.constant 1.000000e+00 : f32
    %50 = vector.broadcast %cst_15 : f32 to vector<1x128xf32>
    %51 = arith.addf %50, %49 : vector<1x128xf32>
    %52 = arith.divf %50, %51 : vector<1x128xf32>
    %53 = vector.extract_strided_slice %52 {offsets = [0, 0], sizes = [1, 32], strides = [1, 1]} : vector<1x128xf32> to vector<1x32xf32>
    %54 = vector.extract_strided_slice %52 {offsets = [0, 32], sizes = [1, 32], strides = [1, 1]} : vector<1x128xf32> to vector<1x32xf32>
    %55 = vector.extract_strided_slice %52 {offsets = [0, 96], sizes = [1, 32], strides = [1, 1]} : vector<1x128xf32> to vector<1x32xf32>
    %56 = vector.extract_strided_slice %47 {offsets = [0, 64], sizes = [1, 32], strides = [1, 1]} : vector<1x128xf32> to vector<1x32xf32>
    %57 = math.tanh %56 : vector<1x32xf32>
    %58 = arith.mulf %54, %42 : vector<1x32xf32>
    %59 = arith.mulf %53, %57 : vector<1x32xf32>
    %60 = arith.addf %58, %59 : vector<1x32xf32>
    %61 = math.tanh %60 : vector<1x32xf32>
    %62 = arith.mulf %55, %61 : vector<1x32xf32>
    %63 = vector.extract_strided_slice %5 {offsets = [3, 0], sizes = [1, 128], strides = [1, 1]} : vector<8x128xf32> to vector<1x128xf32>
    %cst_16 = arith.constant dense<0.000000e+00> : vector<1x128xf32>
    %64 = tpu.matmul %62, %6, %cst_16 {dimension_numbers = #tpu.dot_dimension_numbers<[1], [0], [0], [1], [0, 0, 1, 1], [], []>} : vector<1x32xf32>, vector<32x128xf32>, vector<1x128xf32> -> vector<1x128xf32>
    %65 = arith.addf %63, %64 : vector<1x128xf32>
    %66 = arith.negf %65 : vector<1x128xf32>
    %67 = math.exp %66 : vector<1x128xf32>
    %cst_17 = arith.constant 1.000000e+00 : f32
    %68 = vector.broadcast %cst_17 : f32 to vector<1x128xf32>
    %69 = arith.addf %68, %67 : vector<1x128xf32>
    %70 = arith.divf %68, %69 : vector<1x128xf32>
    %71 = vector.extract_strided_slice %70 {offsets = [0, 0], sizes = [1, 32], strides = [1, 1]} : vector<1x128xf32> to vector<1x32xf32>
    %72 = vector.extract_strided_slice %70 {offsets = [0, 32], sizes = [1, 32], strides = [1, 1]} : vector<1x128xf32> to vector<1x32xf32>
    %73 = vector.extract_strided_slice %70 {offsets = [0, 96], sizes = [1, 32], strides = [1, 1]} : vector<1x128xf32> to vector<1x32xf32>
    %74 = vector.extract_strided_slice %65 {offsets = [0, 64], sizes = [1, 32], strides = [1, 1]} : vector<1x128xf32> to vector<1x32xf32>
    %75 = math.tanh %74 : vector<1x32xf32>
    %76 = arith.mulf %72, %60 : vector<1x32xf32>
    %77 = arith.mulf %71, %75 : vector<1x32xf32>
    %78 = arith.addf %76, %77 : vector<1x32xf32>
    %79 = math.tanh %78 : vector<1x32xf32>
    %80 = arith.mulf %73, %79 : vector<1x32xf32>
    %81 = vector.extract_strided_slice %5 {offsets = [4, 0], sizes = [1, 128], strides = [1, 1]} : vector<8x128xf32> to vector<1x128xf32>
    %cst_18 = arith.constant dense<0.000000e+00> : vector<1x128xf32>
    %82 = tpu.matmul %80, %6, %cst_18 {dimension_numbers = #tpu.dot_dimension_numbers<[1], [0], [0], [1], [0, 0, 1, 1], [], []>} : vector<1x32xf32>, vector<32x128xf32>, vector<1x128xf32> -> vector<1x128xf32>
    %83 = arith.addf %81, %82 : vector<1x128xf32>
    %84 = arith.negf %83 : vector<1x128xf32>
    %85 = math.exp %84 : vector<1x128xf32>
    %cst_19 = arith.constant 1.000000e+00 : f32
    %86 = vector.broadcast %cst_19 : f32 to vector<1x128xf32>
    %87 = arith.addf %86, %85 : vector<1x128xf32>
    %88 = arith.divf %86, %87 : vector<1x128xf32>
    %89 = vector.extract_strided_slice %88 {offsets = [0, 0], sizes = [1, 32], strides = [1, 1]} : vector<1x128xf32> to vector<1x32xf32>
    %90 = vector.extract_strided_slice %88 {offsets = [0, 32], sizes = [1, 32], strides = [1, 1]} : vector<1x128xf32> to vector<1x32xf32>
    %91 = vector.extract_strided_slice %88 {offsets = [0, 96], sizes = [1, 32], strides = [1, 1]} : vector<1x128xf32> to vector<1x32xf32>
    %92 = vector.extract_strided_slice %83 {offsets = [0, 64], sizes = [1, 32], strides = [1, 1]} : vector<1x128xf32> to vector<1x32xf32>
    %93 = math.tanh %92 : vector<1x32xf32>
    %94 = arith.mulf %90, %78 : vector<1x32xf32>
    %95 = arith.mulf %89, %93 : vector<1x32xf32>
    %96 = arith.addf %94, %95 : vector<1x32xf32>
    %97 = math.tanh %96 : vector<1x32xf32>
    %98 = arith.mulf %91, %97 : vector<1x32xf32>
    %99 = vector.extract_strided_slice %5 {offsets = [5, 0], sizes = [1, 128], strides = [1, 1]} : vector<8x128xf32> to vector<1x128xf32>
    %cst_20 = arith.constant dense<0.000000e+00> : vector<1x128xf32>
    %100 = tpu.matmul %98, %6, %cst_20 {dimension_numbers = #tpu.dot_dimension_numbers<[1], [0], [0], [1], [0, 0, 1, 1], [], []>} : vector<1x32xf32>, vector<32x128xf32>, vector<1x128xf32> -> vector<1x128xf32>
    %101 = arith.addf %99, %100 : vector<1x128xf32>
    %102 = arith.negf %101 : vector<1x128xf32>
    %103 = math.exp %102 : vector<1x128xf32>
    %cst_21 = arith.constant 1.000000e+00 : f32
    %104 = vector.broadcast %cst_21 : f32 to vector<1x128xf32>
    %105 = arith.addf %104, %103 : vector<1x128xf32>
    %106 = arith.divf %104, %105 : vector<1x128xf32>
    %107 = vector.extract_strided_slice %106 {offsets = [0, 0], sizes = [1, 32], strides = [1, 1]} : vector<1x128xf32> to vector<1x32xf32>
    %108 = vector.extract_strided_slice %106 {offsets = [0, 32], sizes = [1, 32], strides = [1, 1]} : vector<1x128xf32> to vector<1x32xf32>
    %109 = vector.extract_strided_slice %106 {offsets = [0, 96], sizes = [1, 32], strides = [1, 1]} : vector<1x128xf32> to vector<1x32xf32>
    %110 = vector.extract_strided_slice %101 {offsets = [0, 64], sizes = [1, 32], strides = [1, 1]} : vector<1x128xf32> to vector<1x32xf32>
    %111 = math.tanh %110 : vector<1x32xf32>
    %112 = arith.mulf %108, %96 : vector<1x32xf32>
    %113 = arith.mulf %107, %111 : vector<1x32xf32>
    %114 = arith.addf %112, %113 : vector<1x32xf32>
    %115 = math.tanh %114 : vector<1x32xf32>
    %116 = arith.mulf %109, %115 : vector<1x32xf32>
    %117 = vector.extract_strided_slice %5 {offsets = [6, 0], sizes = [1, 128], strides = [1, 1]} : vector<8x128xf32> to vector<1x128xf32>
    %cst_22 = arith.constant dense<0.000000e+00> : vector<1x128xf32>
    %118 = tpu.matmul %116, %6, %cst_22 {dimension_numbers = #tpu.dot_dimension_numbers<[1], [0], [0], [1], [0, 0, 1, 1], [], []>} : vector<1x32xf32>, vector<32x128xf32>, vector<1x128xf32> -> vector<1x128xf32>
    %119 = arith.addf %117, %118 : vector<1x128xf32>
    %120 = arith.negf %119 : vector<1x128xf32>
    %121 = math.exp %120 : vector<1x128xf32>
    %cst_23 = arith.constant 1.000000e+00 : f32
    %122 = vector.broadcast %cst_23 : f32 to vector<1x128xf32>
    %123 = arith.addf %122, %121 : vector<1x128xf32>
    %124 = arith.divf %122, %123 : vector<1x128xf32>
    %125 = vector.extract_strided_slice %124 {offsets = [0, 0], sizes = [1, 32], strides = [1, 1]} : vector<1x128xf32> to vector<1x32xf32>
    %126 = vector.extract_strided_slice %124 {offsets = [0, 32], sizes = [1, 32], strides = [1, 1]} : vector<1x128xf32> to vector<1x32xf32>
    %127 = vector.extract_strided_slice %124 {offsets = [0, 96], sizes = [1, 32], strides = [1, 1]} : vector<1x128xf32> to vector<1x32xf32>
    %128 = vector.extract_strided_slice %119 {offsets = [0, 64], sizes = [1, 32], strides = [1, 1]} : vector<1x128xf32> to vector<1x32xf32>
    %129 = math.tanh %128 : vector<1x32xf32>
    %130 = arith.mulf %126, %114 : vector<1x32xf32>
    %131 = arith.mulf %125, %129 : vector<1x32xf32>
    %132 = arith.addf %130, %131 : vector<1x32xf32>
    %133 = math.tanh %132 : vector<1x32xf32>
    %134 = arith.mulf %127, %133 : vector<1x32xf32>
    %135 = vector.extract_strided_slice %5 {offsets = [7, 0], sizes = [1, 128], strides = [1, 1]} : vector<8x128xf32> to vector<1x128xf32>
    %cst_24 = arith.constant dense<0.000000e+00> : vector<1x128xf32>
    %136 = tpu.matmul %134, %6, %cst_24 {dimension_numbers = #tpu.dot_dimension_numbers<[1], [0], [0], [1], [0, 0, 1, 1], [], []>} : vector<1x32xf32>, vector<32x128xf32>, vector<1x128xf32> -> vector<1x128xf32>
    %137 = arith.addf %135, %136 : vector<1x128xf32>
    %138 = arith.negf %137 : vector<1x128xf32>
    %139 = math.exp %138 : vector<1x128xf32>
    %cst_25 = arith.constant 1.000000e+00 : f32
    %140 = vector.broadcast %cst_25 : f32 to vector<1x128xf32>
    %141 = arith.addf %140, %139 : vector<1x128xf32>
    %142 = arith.divf %140, %141 : vector<1x128xf32>
    %143 = vector.extract_strided_slice %142 {offsets = [0, 0], sizes = [1, 32], strides = [1, 1]} : vector<1x128xf32> to vector<1x32xf32>
    %144 = vector.extract_strided_slice %142 {offsets = [0, 32], sizes = [1, 32], strides = [1, 1]} : vector<1x128xf32> to vector<1x32xf32>
    %145 = vector.extract_strided_slice %142 {offsets = [0, 96], sizes = [1, 32], strides = [1, 1]} : vector<1x128xf32> to vector<1x32xf32>
    %146 = vector.extract_strided_slice %137 {offsets = [0, 64], sizes = [1, 32], strides = [1, 1]} : vector<1x128xf32> to vector<1x32xf32>
    %147 = math.tanh %146 : vector<1x32xf32>
    %148 = arith.mulf %144, %132 : vector<1x32xf32>
    %149 = arith.mulf %143, %147 : vector<1x32xf32>
    %150 = arith.addf %148, %149 : vector<1x32xf32>
    %151 = math.tanh %150 : vector<1x32xf32>
    %152 = arith.mulf %145, %151 : vector<1x32xf32>
    %c0_26 = arith.constant 0 : index
    %c0_27 = arith.constant 0 : index
    %153 = vector.load %arg8[%c0_26, %c0_27] : memref<2x32xf32, #tpu.memory_space<vmem>>, vector<1x32xf32>
    tpu.vector_store %arg8[%c0_26, %c0_27], %152 {strides = array<i32>} : memref<2x32xf32, #tpu.memory_space<vmem>>, vector<1x32xf32>,
    %c1_28 = arith.constant 1 : index
    %c0_29 = arith.constant 0 : index
    %154 = vector.load %arg8[%c1_28, %c0_29] : memref<2x32xf32, #tpu.memory_space<vmem>>, vector<1x32xf32>
    tpu.vector_store %arg8[%c1_28, %c0_29], %150 {strides = array<i32>} : memref<2x32xf32, #tpu.memory_space<vmem>>, vector<1x32xf32>,
    %c0_30 = arith.constant 0 : index
    %c0_31 = arith.constant 0 : index
    %155 = vector.load %arg5[%c0_30, %c0_31] : memref<32x4xf32, #tpu.memory_space<vmem>>, vector<32x4xf32>
    %cst_32 = arith.constant dense<0.000000e+00> : vector<1x4xf32>
    %156 = tpu.matmul %152, %155, %cst_32 {dimension_numbers = #tpu.dot_dimension_numbers<[1], [0], [0], [1], [0, 0, 1, 1], [], []>} : vector<1x32xf32>, vector<32x4xf32>, vector<1x4xf32> -> vector<1x4xf32>
    %c0_33 = arith.constant 0 : index
    %c0_34 = arith.constant 0 : index
    %157 = vector.load %arg6[%c0_33, %c0_34] : memref<1x4xf32, #tpu.memory_space<vmem>>, vector<1x4xf32>
    %158 = arith.addf %156, %157 : vector<1x4xf32>
    %c0_35 = arith.constant 0 : index
    %c0_36 = arith.constant 0 : index
    %159 = vector.load %arg7[%c0_35, %c0_36] : memref<1x4xf32, #tpu.memory_space<vmem>>, vector<1x4xf32>
    tpu.vector_store %arg7[%c0_35, %c0_36], %158 {strides = array<i32>} : memref<1x4xf32, #tpu.memory_space<vmem>>, vector<1x4xf32>,
    return
  }
}

</mosaic_0001>

<llo_original>
// kernel: tpu_custom_call.1
$region0: #{tpu_custom_call.1}
  #allocation0 [shape = 'u32[]', space=smem, size = 0x4, offset = 0x4, fixed_abs, tag = 'smem constant byte address 0x4 - core index']
  #allocation1 [shape = 'u32[144,128]{1,0:T(1,128)}', space=vmem, size = 0x12000, scoped, tag = 'internal scratch']
  %s0 = inlined_call_operand.vmem [shape: f32[8,4], index: 0, kind: input, shape index: {}]
  %s1 = inlined_call_operand.vmem [shape: f32[4,128], index: 1, kind: input, shape index: {}]
  %s2 = inlined_call_operand.vmem [shape: f32[32,128], index: 2, kind: input, shape index: {}]
  %s3 = inlined_call_operand.vmem [shape: f32[1,128], index: 3, kind: input, shape index: {}]
  %s4 = inlined_call_operand.vmem [shape: f32[2,32], index: 4, kind: input, shape index: {}]
  %s5 = inlined_call_operand.vmem [shape: f32[32,4], index: 5, kind: input, shape index: {}]
  %s6 = inlined_call_operand.vmem [shape: f32[1,4], index: 6, kind: input, shape index: {}]
  %s7 = inlined_call_operand.hbm [shape: f32[1,4], index: 7, kind: output, shape index: {0}]
  %s8 = inlined_call_operand.hbm [shape: f32[2,32], index: 8, kind: output, shape index: {1}]
  %9 = xla_tuple %s7, %s8
  %s10 = sld [smem:[#allocation0]]
  $region46: #{tpu_custom_call.1} parent=0
    _
  %s12 = ssub.s32 1, %s10
  %s13 = scalar_select 0, %s12, %s10
  $region1: #{tpu_custom_call.1} parent=0
    #allocation2 [shape = 'u8[512]{0}', space=vmem, size = 0x400, scoped, tag = 'output window, operand 0, single buffered']
    #allocation3 [shape = 's32[1]{0}', space=sflag, size = 0x4, scoped, tag = 'scoped memory for tpu_custom_call.1']
    #allocation4 [shape = 'u8[1024]{0}', space=vmem, size = 0x400, scoped, tag = 'output window, operand 1, single buffered']
    #allocation5 [shape = 's32[1]{0}', space=sflag, size = 0x4, scoped, tag = 'scoped memory for tpu_custom_call.1']
    %14 = vsyncpa [#allocation3], 0
    %15 = vsyncpa [#allocation5], 0
    // Predicated region
    $region2: #{tpu_custom_call.1} parent=1 // pred_check
      _
    $region3: #{tpu_custom_call.1} parent=1 // pred_check_branch
      %17 = sbr.rel (0) target = $region5
    $region4: #{tpu_custom_call.1} parent=1 // pred_region
      _
    $region5: #{tpu_custom_call.1} parent=1 // pred_fallthru
      _
    // Predicated region
    $region6: #{tpu_custom_call.1} parent=1 // pred_check
      _
    $region7: #{tpu_custom_call.1} parent=1 // pred_check_branch
      %19 = sbr.rel (0) target = $region9
    $region8: #{tpu_custom_call.1} parent=1 // pred_region
      _
    $region9: #{tpu_custom_call.1} parent=1 // pred_fallthru
      _
    // Predicated region
    $region10: #{tpu_custom_call.1} parent=1 // pred_check
      _
    $region11: #{tpu_custom_call.1} parent=1 // pred_check_branch
      %21 = sbr.rel (0) target = $region13
    $region12: #{tpu_custom_call.1} parent=1 // pred_region
      _
    $region13: #{tpu_custom_call.1} parent=1 // pred_fallthru
      _
    // Predicated region
    $region14: #{tpu_custom_call.1} parent=1 // pred_check
      _
    $region15: #{tpu_custom_call.1} parent=1 // pred_check_branch
      %23 = sbr.rel (0) target = $region17
    $region16: #{tpu_custom_call.1} parent=1 // pred_region
      _
    $region17: #{tpu_custom_call.1} parent=1 // pred_fallthru
      _
    // Predicated region
    $region18: #{tpu_custom_call.1} parent=1 // pred_check
      _
    $region19: #{tpu_custom_call.1} parent=1 // pred_check_branch
      %25 = sbr.rel (0) target = $region21
    $region20: #{tpu_custom_call.1} parent=1 // pred_region
      _
    $region21: #{tpu_custom_call.1} parent=1 // pred_fallthru
      _
    // Predicated region
    $region22: #{tpu_custom_call.1} parent=1 // pred_check
      _
    $region23: #{tpu_custom_call.1} parent=1 // pred_check_branch
      %27 = sbr.rel (0) target = $region25
    $region24: #{tpu_custom_call.1} parent=1 // pred_region
      _
    $region25: #{tpu_custom_call.1} parent=1 // pred_fallthru
      _
    // Predicated region
    $region26: #{tpu_custom_call.1} parent=1 // pred_check
      _
    $region27: #{tpu_custom_call.1} parent=1 // pred_check_branch
      %29 = sbr.rel (0) target = $region29
    $region28: #{tpu_custom_call.1} parent=1 // pred_region
      _
    $region29: #{tpu_custom_call.1} parent=1 // pred_fallthru
      _
    %v30 = vld [vmem:[%s0] sm:$0xff]
    %v31 = vld [vmem:[%s1] sm:$0xf]
    %v32 = vld [vmem:[%s3] sm:$0x1]
    %v34 = vlaneseq
    %v35 = vshrl.u32 %v34, 7
    %v36 = vsub.s32 0, %v35
    %v37 = vrot.slane %v32, %v36
    %vm39 = vcmask 31744
    %v41 = vsel %vm39, %v30, 0
    %vm43 = vcmask 1043456
    %v45 = vsel %vm43, %v31, 0
    %47 = vmatprep.subr.mxu0 0.0
    %48 = vmatpush1.msra.mxu0 %v45
    %49 = vmatprep.subr.mxu0 0.0
    %50 = vmatpush1.msra.mxu0 0.0
    %51 = vmatprep.subr.mxu0 0.0
    %52 = vmatpush1.msra.mxu0 0.0
    %53 = vmatprep.subr.mxu0 0.0
    %54 = vmatpush1.msra.mxu0 0.0
    %55 = vmatprep.subr.mxu0 0.0
    %56 = vmatpush1.msra.mxu0 0.0
    %57 = vmatprep.subr.mxu0 0.0
    %58 = vmatpush1.msra.mxu0 0.0
    %59 = vmatprep.subr.mxu0 0.0
    %60 = vmatpush1.msra.mxu0 0.0
    %61 = vmatprep.subr.mxu0 0.0
    %62 = vmatpush1.msra.mxu0 0.0
    %63 = vmatprep.subr.mxu0 0.0
    %64 = vmatpush1.msra.mxu0 0.0
    %65 = vmatprep.subr.mxu0 0.0
    %66 = vmatpush1.msra.mxu0 0.0
    %67 = vmatprep.subr.mxu0 0.0
    %68 = vmatpush1.msra.mxu0 0.0
    %69 = vmatprep.subr.mxu0 0.0
    %70 = vmatpush1.msra.mxu0 0.0
    %71 = vmatprep.subr.mxu0 0.0
    %72 = vmatpush1.msra.mxu0 0.0
    %73 = vmatprep.subr.mxu0 0.0
    %74 = vmatpush1.msra.mxu0 0.0
    %75 = vmatprep.subr.mxu0 0.0
    %76 = vmatpush1.msra.mxu0 0.0
    %77 = vmatprep.subr.mxu0 0.0
    %78 = vmatpush1.msra.mxu0 0.0
    %79 = vmatprep.subr.mxu0 0.0
    %80 = vmatpush1.msra.mxu0 0.0
    %81 = vmatprep.subr.mxu0 0.0
    %82 = vmatpush1.msra.mxu0 0.0
    %83 = vmatprep.subr.mxu0 0.0
    %84 = vmatpush1.msra.mxu0 0.0
    %85 = vmatprep.subr.mxu0 0.0
    %86 = vmatpush1.msra.mxu0 0.0
    %87 = vmatprep.subr.mxu0 0.0
    %88 = vmatpush1.msra.mxu0 0.0
    %89 = vmatprep.subr.mxu0 0.0
    %90 = vmatpush1.msra.mxu0 0.0
    %91 = vmatprep.subr.mxu0 0.0
    %92 = vmatpush1.msra.mxu0 0.0
    %93 = vmatprep.subr.mxu0 0.0
    %94 = vmatpush1.msra.mxu0 0.0
    %95 = vmatprep.subr.mxu0 0.0
    %96 = vmatpush1.msra.mxu0 0.0
    %97 = vmatprep.subr.mxu0 0.0
    %98 = vmatpush1.msra.mxu0 0.0
    %99 = vmatprep.subr.mxu0 0.0
    %100 = vmatpush1.msra.mxu0 0.0
    %101 = vmatprep.subr.mxu0 0.0
    %102 = vmatpush1.msra.mxu0 0.0
    %103 = vmatprep.subr.mxu0 0.0
    %104 = vmatpush1.msra.mxu0 0.0
    %105 = vmatprep.subr.mxu0 0.0
    %106 = vmatpush1.msra.mxu0 0.0
    %107 = vmatprep.subr.mxu0 0.0
    %108 = vmatpush1.msra.mxu0 0.0
    %109 = vmatprep.subr.mxu0 0.0
    %110 = vmatpush1.msra.mxu0 0.0
    %111 = vmatprep.mubr.f32.mxu0 0.0
    %112 = vmatmul.mubr.f32.gmra.mrb[0].mxu0 %v41
    %v113 = vpop.f32.mrb[0].mxu0
    %v114 = vadd.f32 %v37, %v113
    %v115 = vpop.f32.mrb[0].mxu0
    %116 = vdwg.mxu0
    %v117 = vld [vmem:[%s2] sm:$0xff]
    %v118 = vld [vmem:[%s2 + $0x8] sm:$0xff]
    %v119 = vld [vmem:[%s2 + $0x10] sm:$0xff]
    %v120 = vld [vmem:[%s2 + $0x18] sm:$0xff]
    %v121 = vld [vmem:[%s4] sm:$0x1]
    %v122 = vld [vmem:[%s4 + $0x1] sm:$0x1]
    %vm123 = vcmask 261120
    %v125 = vsel %vm123, %v121, 0
    %127 = vmatprep.subr.mxu0 0.0
    %128 = vmatpush1.msra.mxu0 %v117
    %129 = vmatprep.subr.mxu0 0.0
    %130 = vmatpush1.msra.mxu0 %v118
    %131 = vmatprep.subr.mxu0 0.0
    %132 = vmatpush1.msra.mxu0 %v119
    %133 = vmatprep.subr.mxu0 0.0
    %134 = vmatpush1.msra.mxu0 %v120
    %135 = vmatprep.subr.mxu0 0.0
    %136 = vmatpush1.msra.mxu0 0.0
    %137 = vmatprep.subr.mxu0 0.0
    %138 = vmatpush1.msra.mxu0 0.0
    %139 = vmatprep.subr.mxu0 0.0
    %140 = vmatpush1.msra.mxu0 0.0
    %141 = vmatprep.subr.mxu0 0.0
    %142 = vmatpush1.msra.mxu0 0.0
    %143 = vmatprep.subr.mxu0 0.0
    %144 = vmatpush1.msra.mxu0 0.0
    %145 = vmatprep.subr.mxu0 0.0
    %146 = vmatpush1.msra.mxu0 0.0
    %147 = vmatprep.subr.mxu0 0.0
    %148 = vmatpush1.msra.mxu0 0.0
    %149 = vmatprep.subr.mxu0 0.0
    %150 = vmatpush1.msra.mxu0 0.0
    %151 = vmatprep.subr.mxu0 0.0
    %152 = vmatpush1.msra.mxu0 0.0
    %153 = vmatprep.subr.mxu0 0.0
    %154 = vmatpush1.msra.mxu0 0.0
    %155 = vmatprep.subr.mxu0 0.0
    %156 = vmatpush1.msra.mxu0 0.0
    %157 = vmatprep.subr.mxu0 0.0
    %158 = vmatpush1.msra.mxu0 0.0
    %159 = vmatprep.subr.mxu0 0.0
    %160 = vmatpush1.msra.mxu0 0.0
    %161 = vmatprep.subr.mxu0 0.0
    %162 = vmatpush1.msra.mxu0 0.0
    %163 = vmatprep.subr.mxu0 0.0
    %164 = vmatpush1.msra.mxu0 0.0
    %165 = vmatprep.subr.mxu0 0.0
    %166 = vmatpush1.msra.mxu0 0.0
    %167 = vmatprep.subr.mxu0 0.0
    %168 = vmatpush1.msra.mxu0 0.0
    %169 = vmatprep.subr.mxu0 0.0
    %170 = vmatpush1.msra.mxu0 0.0
    %171 = vmatprep.subr.mxu0 0.0
    %172 = vmatpush1.msra.mxu0 0.0
    %173 = vmatprep.subr.mxu0 0.0
    %174 = vmatpush1.msra.mxu0 0.0
    %175 = vmatprep.subr.mxu0 0.0
    %176 = vmatpush1.msra.mxu0 0.0
    %177 = vmatprep.subr.mxu0 0.0
    %178 = vmatpush1.msra.mxu0 0.0
    %179 = vmatprep.subr.mxu0 0.0
    %180 = vmatpush1.msra.mxu0 0.0
    %181 = vmatprep.subr.mxu0 0.0
    %182 = vmatpush1.msra.mxu0 0.0
    %183 = vmatprep.subr.mxu0 0.0
    %184 = vmatpush1.msra.mxu0 0.0
    %185 = vmatprep.subr.mxu0 0.0
    %186 = vmatpush1.msra.mxu0 0.0
    %187 = vmatprep.subr.mxu0 0.0
    %188 = vmatpush1.msra.mxu0 0.0
    %189 = vmatprep.subr.mxu0 0.0
    %190 = vmatpush1.msra.mxu0 0.0
    %191 = vmatprep.mubr.f32.mxu0 0.0
    %192 = vmatmul.mubr.f32.gmra.mrb[0].mxu0 %v125
    %v193 = vpop.f32.mrb[0].mxu0
    %v194 = vadd.f32 0.0, %v193
    %v195 = vpop.f32.mrb[0].mxu0
    %196 = vdwg.mxu0
    %v197 = vadd.f32 %v114, %v194
    %v198 = vxor.u32 %v197, 2147483648
    %v199 = vmul.f32 %v198, 1.442695
    %v200 = vpow.pop %v199
    %v201 = vadd.f32 %v200, 1.0
    %v202 = vrcp.pop %v201
    %v203 = vmul.f32 1.0, %v202
    %v204 = vtanh.pop %v197
    %206 = vrot.lane.b32.xlu0 %v122, 32
    %v207 = vpop.permute.xlu0 %206
    %v209 = vmul.f32 %v203, %v207
    %211 = vrot.lane.b32.xlu0 %v204, 64
    %v212 = vpop.permute.xlu0 %211
    %v214 = vmul.f32 %v203, %v212
    %216 = vrot.lane.b32.xlu0 %v214, 32
    %v217 = vpop.permute.xlu0 %216
    %v219 = vadd.f32 %v209, %v217
    %v220 = vtanh.pop %v219
    %222 = vrot.lane.b32.xlu0 %v220, 64
    %v223 = vpop.permute.xlu0 %222
    %v225 = vmul.f32 %v203, %v223
    %227 = vrot.lane.b32.xlu0 %v225, 32
    %v228 = vpop.permute.xlu0 %227
    %v229 = vsel %vm123, %v228, 0
    %231 = vmatprep.subr.mxu0 0.0
    %232 = vmatpush1.msra.mxu0 %v117
    %233 = vmatprep.subr.mxu0 0.0
    %234 = vmatpush1.msra.mxu0 %v118
    %235 = vmatprep.subr.mxu0 0.0
    %236 = vmatpush1.msra.mxu0 %v119
    %237 = vmatprep.subr.mxu0 0.0
    %238 = vmatpush1.msra.mxu0 %v120
    %239 = vmatprep.subr.mxu0 0.0
    %240 = vmatpush1.msra.mxu0 0.0
    %241 = vmatprep.subr.mxu0 0.0
    %242 = vmatpush1.msra.mxu0 0.0
    %243 = vmatprep.subr.mxu0 0.0
    %244 = vmatpush1.msra.mxu0 0.0
    %245 = vmatprep.subr.mxu0 0.0
    %246 = vmatpush1.msra.mxu0 0.0
    %247 = vmatprep.subr.mxu0 0.0
    %248 = vmatpush1.msra.mxu0 0.0
    %249 = vmatprep.subr.mxu0 0.0
    %250 = vmatpush1.msra.mxu0 0.0
    %251 = vmatprep.subr.mxu0 0.0
    %252 = vmatpush1.msra.mxu0 0.0
    %253 = vmatprep.subr.mxu0 0.0
    %254 = vmatpush1.msra.mxu0 0.0
    %255 = vmatprep.subr.mxu0 0.0
    %256 = vmatpush1.msra.mxu0 0.0
    %257 = vmatprep.subr.mxu0 0.0
    %258 = vmatpush1.msra.mxu0 0.0
    %259 = vmatprep.subr.mxu0 0.0
    %260 = vmatpush1.msra.mxu0 0.0
    %261 = vmatprep.subr.mxu0 0.0
    %262 = vmatpush1.msra.mxu0 0.0
    %263 = vmatprep.subr.mxu0 0.0
    %264 = vmatpush1.msra.mxu0 0.0
    %265 = vmatprep.subr.mxu0 0.0
    %266 = vmatpush1.msra.mxu0 0.0
    %267 = vmatprep.subr.mxu0 0.0
    %268 = vmatpush1.msra.mxu0 0.0
    %269 = vmatprep.subr.mxu0 0.0
    %270 = vmatpush1.msra.mxu0 0.0
    %271 = vmatprep.subr.mxu0 0.0
    %272 = vmatpush1.msra.mxu0 0.0
    %273 = vmatprep.subr.mxu0 0.0
    %274 = vmatpush1.msra.mxu0 0.0
    %275 = vmatprep.subr.mxu0 0.0
    %276 = vmatpush1.msra.mxu0 0.0
    %277 = vmatprep.subr.mxu0 0.0
    %278 = vmatpush1.msra.mxu0 0.0
    %279 = vmatprep.subr.mxu0 0.0
    %280 = vmatpush1.msra.mxu0 0.0
    %281 = vmatprep.subr.mxu0 0.0
    %282 = vmatpush1.msra.mxu0 0.0
    %283 = vmatprep.subr.mxu0 0.0
    %284 = vmatpush1.msra.mxu0 0.0
    %285 = vmatprep.subr.mxu0 0.0
    %286 = vmatpush1.msra.mxu0 0.0
    %287 = vmatprep.subr.mxu0 0.0
    %288 = vmatpush1.msra.mxu0 0.0
    %289 = vmatprep.subr.mxu0 0.0
    %290 = vmatpush1.msra.mxu0 0.0
    %291 = vmatprep.subr.mxu0 0.0
    %292 = vmatpush1.msra.mxu0 0.0
    %293 = vmatprep.subr.mxu0 0.0
    %294 = vmatpush1.msra.mxu0 0.0
    %295 = vmatprep.mubr.f32.mxu0 0.0
    %296 = vmatmul.mubr.f32.gmra.mrb[0].mxu0 %v229
    %v297 = vpop.f32.mrb[0].mxu0
    %v298 = vadd.f32 0.0, %v297
    %v299 = vpop.f32.mrb[0].mxu0
    %300 = vdwg.mxu0
    %v302 = vrot.slane %v298, 7
    %v304 = vadd.f32 %v114, %v302
    %v305 = vxor.u32 %v304, 2147483648
    %v306 = vmul.f32 %v305, 1.442695
    %v307 = vpow.pop %v306
    %v308 = vadd.f32 %v307, 1.0
    %v309 = vrcp.pop %v308
    %v310 = vmul.f32 1.0, %v309
    %v311 = vtanh.pop %v304
    %v313 = vrot.slane %v219, 7
    %v315 = vmul.f32 %v310, %v313
    %317 = vrot.lane.b32.xlu0 %v311, 64
    %v318 = vpop.permute.xlu0 %317
    %v320 = vmul.f32 %v310, %v318
    %322 = vrot.lane.b32.xlu0 %v320, 32
    %v323 = vpop.permute.xlu0 %322
    %v325 = vadd.f32 %v315, %v323
    %v326 = vtanh.pop %v325
    %328 = vrot.lane.b32.xlu0 %v326, 64
    %v329 = vpop.permute.xlu0 %328
    %v331 = vmul.f32 %v310, %v329
    %v333 = vrot.slane %v331, 1
    %334 = vrot.lane.b32.xlu0 %v333, 32
    %v335 = vpop.permute.xlu0 %334
    %v336 = vsel %vm123, %v335, 0
    %338 = vmatprep.subr.mxu0 0.0
    %339 = vmatpush1.msra.mxu0 %v117
    %340 = vmatprep.subr.mxu0 0.0
    %341 = vmatpush1.msra.mxu0 %v118
    %342 = vmatprep.subr.mxu0 0.0
    %343 = vmatpush1.msra.mxu0 %v119
    %344 = vmatprep.subr.mxu0 0.0
    %345 = vmatpush1.msra.mxu0 %v120
    %346 = vmatprep.subr.mxu0 0.0
    %347 = vmatpush1.msra.mxu0 0.0
    %348 = vmatprep.subr.mxu0 0.0
    %349 = vmatpush1.msra.mxu0 0.0
    %350 = vmatprep.subr.mxu0 0.0
    %351 = vmatpush1.msra.mxu0 0.0
    %352 = vmatprep.subr.mxu0 0.0
    %353 = vmatpush1.msra.mxu0 0.0
    %354 = vmatprep.subr.mxu0 0.0
    %355 = vmatpush1.msra.mxu0 0.0
    %356 = vmatprep.subr.mxu0 0.0
    %357 = vmatpush1.msra.mxu0 0.0
    %358 = vmatprep.subr.mxu0 0.0
    %359 = vmatpush1.msra.mxu0 0.0
    %360 = vmatprep.subr.mxu0 0.0
    %361 = vmatpush1.msra.mxu0 0.0
    %362 = vmatprep.subr.mxu0 0.0
    %363 = vmatpush1.msra.mxu0 0.0
    %364 = vmatprep.subr.mxu0 0.0
    %365 = vmatpush1.msra.mxu0 0.0
    %366 = vmatprep.subr.mxu0 0.0
    %367 = vmatpush1.msra.mxu0 0.0
    %368 = vmatprep.subr.mxu0 0.0
    %369 = vmatpush1.msra.mxu0 0.0
    %370 = vmatprep.subr.mxu0 0.0
    %371 = vmatpush1.msra.mxu0 0.0
    %372 = vmatprep.subr.mxu0 0.0
    %373 = vmatpush1.msra.mxu0 0.0
    %374 = vmatprep.subr.mxu0 0.0
    %375 = vmatpush1.msra.mxu0 0.0
    %376 = vmatprep.subr.mxu0 0.0
    %377 = vmatpush1.msra.mxu0 0.0
    %378 = vmatprep.subr.mxu0 0.0
    %379 = vmatpush1.msra.mxu0 0.0
    %380 = vmatprep.subr.mxu0 0.0
    %381 = vmatpush1.msra.mxu0 0.0
    %382 = vmatprep.subr.mxu0 0.0
    %383 = vmatpush1.msra.mxu0 0.0
    %384 = vmatprep.subr.mxu0 0.0
    %385 = vmatpush1.msra.mxu0 0.0
    %386 = vmatprep.subr.mxu0 0.0
    %387 = vmatpush1.msra.mxu0 0.0
    %388 = vmatprep.subr.mxu0 0.0
    %389 = vmatpush1.msra.mxu0 0.0
    %390 = vmatprep.subr.mxu0 0.0
    %391 = vmatpush1.msra.mxu0 0.0
    %392 = vmatprep.subr.mxu0 0.0
    %393 = vmatpush1.msra.mxu0 0.0
    %394 = vmatprep.subr.mxu0 0.0
    %395 = vmatpush1.msra.mxu0 0.0
    %396 = vmatprep.subr.mxu0 0.0
    %397 = vmatpush1.msra.mxu0 0.0
    %398 = vmatprep.subr.mxu0 0.0
    %399 = vmatpush1.msra.mxu0 0.0
    %400 = vmatprep.subr.mxu0 0.0
    %401 = vmatpush1.msra.mxu0 0.0
    %402 = vmatprep.mubr.f32.mxu0 0.0
    %403 = vmatmul.mubr.f32.gmra.mrb[0].mxu0 %v336
    %v404 = vpop.f32.mrb[0].mxu0
    %v405 = vadd.f32 0.0, %v404
    %v406 = vpop.f32.mrb[0].mxu0
    %407 = vdwg.mxu0
    %v409 = vrot.slane %v405, 6
    %v411 = vadd.f32 %v114, %v409
    %v412 = vxor.u32 %v411, 2147483648
    %v413 = vmul.f32 %v412, 1.442695
    %v414 = vpow.pop %v413
    %v415 = vadd.f32 %v414, 1.0
    %v416 = vrcp.pop %v415
    %v417 = vmul.f32 1.0, %v416
    %v418 = vtanh.pop %v411
    %v420 = vrot.slane %v325, 7
    %v422 = vmul.f32 %v417, %v420
    %424 = vrot.lane.b32.xlu0 %v418, 64
    %v425 = vpop.permute.xlu0 %424
    %v427 = vmul.f32 %v417, %v425
    %429 = vrot.lane.b32.xlu0 %v427, 32
    %v430 = vpop.permute.xlu0 %429
    %v432 = vadd.f32 %v422, %v430
    %v433 = vtanh.pop %v432
    %435 = vrot.lane.b32.xlu0 %v433, 64
    %v436 = vpop.permute.xlu0 %435
    %v438 = vmul.f32 %v417, %v436
    %v440 = vrot.slane %v438, 2
    %441 = vrot.lane.b32.xlu0 %v440, 32
    %v442 = vpop.permute.xlu0 %441
    %v443 = vsel %vm123, %v442, 0
    %445 = vmatprep.subr.mxu0 0.0
    %446 = vmatpush1.msra.mxu0 %v117
    %447 = vmatprep.subr.mxu0 0.0
    %448 = vmatpush1.msra.mxu0 %v118
    %449 = vmatprep.subr.mxu0 0.0
    %450 = vmatpush1.msra.mxu0 %v119
    %451 = vmatprep.subr.mxu0 0.0
    %452 = vmatpush1.msra.mxu0 %v120
    %453 = vmatprep.subr.mxu0 0.0
    %454 = vmatpush1.msra.mxu0 0.0
    %455 = vmatprep.subr.mxu0 0.0
    %456 = vmatpush1.msra.mxu0 0.0
    %457 = vmatprep.subr.mxu0 0.0
    %458 = vmatpush1.msra.mxu0 0.0
    %459 = vmatprep.subr.mxu0 0.0
    %460 = vmatpush1.msra.mxu0 0.0
    %461 = vmatprep.subr.mxu0 0.0
    %462 = vmatpush1.msra.mxu0 0.0
    %463 = vmatprep.subr.mxu0 0.0
    %464 = vmatpush1.msra.mxu0 0.0
    %465 = vmatprep.subr.mxu0 0.0
    %466 = vmatpush1.msra.mxu0 0.0
    %467 = vmatprep.subr.mxu0 0.0
    %468 = vmatpush1.msra.mxu0 0.0
    %469 = vmatprep.subr.mxu0 0.0
    %470 = vmatpush1.msra.mxu0 0.0
    %471 = vmatprep.subr.mxu0 0.0
    %472 = vmatpush1.msra.mxu0 0.0
    %473 = vmatprep.subr.mxu0 0.0
    %474 = vmatpush1.msra.mxu0 0.0
    %475 = vmatprep.subr.mxu0 0.0
    %476 = vmatpush1.msra.mxu0 0.0
    %477 = vmatprep.subr.mxu0 0.0
    %478 = vmatpush1.msra.mxu0 0.0
    %479 = vmatprep.subr.mxu0 0.0
    %480 = vmatpush1.msra.mxu0 0.0
    %481 = vmatprep.subr.mxu0 0.0
    %482 = vmatpush1.msra.mxu0 0.0
    %483 = vmatprep.subr.mxu0 0.0
    %484 = vmatpush1.msra.mxu0 0.0
    %485 = vmatprep.subr.mxu0 0.0
    %486 = vmatpush1.msra.mxu0 0.0
    %487 = vmatprep.subr.mxu0 0.0
    %488 = vmatpush1.msra.mxu0 0.0
    %489 = vmatprep.subr.mxu0 0.0
    %490 = vmatpush1.msra.mxu0 0.0
    %491 = vmatprep.subr.mxu0 0.0
    %492 = vmatpush1.msra.mxu0 0.0
    %493 = vmatprep.subr.mxu0 0.0
    %494 = vmatpush1.msra.mxu0 0.0
    %495 = vmatprep.subr.mxu0 0.0
    %496 = vmatpush1.msra.mxu0 0.0
    %497 = vmatprep.subr.mxu0 0.0
    %498 = vmatpush1.msra.mxu0 0.0
    %499 = vmatprep.subr.mxu0 0.0
    %500 = vmatpush1.msra.mxu0 0.0
    %501 = vmatprep.subr.mxu0 0.0
    %502 = vmatpush1.msra.mxu0 0.0
    %503 = vmatprep.subr.mxu0 0.0
    %504 = vmatpush1.msra.mxu0 0.0
    %505 = vmatprep.subr.mxu0 0.0
    %506 = vmatpush1.msra.mxu0 0.0
    %507 = vmatprep.subr.mxu0 0.0
    %508 = vmatpush1.msra.mxu0 0.0
    %509 = vmatprep.mubr.f32.mxu0 0.0
    %510 = vmatmul.mubr.f32.gmra.mrb[0].mxu0 %v443
    %v511 = vpop.f32.mrb[0].mxu0
    %v512 = vadd.f32 0.0, %v511
    %v513 = vpop.f32.mrb[0].mxu0
    %514 = vdwg.mxu0
    %v516 = vrot.slane %v512, 5
    %v518 = vadd.f32 %v114, %v516
    %v519 = vxor.u32 %v518, 2147483648
    %v520 = vmul.f32 %v519, 1.442695
    %v521 = vpow.pop %v520
    %v522 = vadd.f32 %v521, 1.0
    %v523 = vrcp.pop %v522
    %v524 = vmul.f32 1.0, %v523
    %v525 = vtanh.pop %v518
    %v527 = vrot.slane %v432, 7
    %v529 = vmul.f32 %v524, %v527
    %531 = vrot.lane.b32.xlu0 %v525, 64
    %v532 = vpop.permute.xlu0 %531
    %v534 = vmul.f32 %v524, %v532
    %536 = vrot.lane.b32.xlu0 %v534, 32
    %v537 = vpop.permute.xlu0 %536
    %v539 = vadd.f32 %v529, %v537
    %v540 = vtanh.pop %v539
    %542 = vrot.lane.b32.xlu0 %v540, 64
    %v543 = vpop.permute.xlu0 %542
    %v545 = vmul.f32 %v524, %v543
    %v547 = vrot.slane %v545, 3
    %548 = vrot.lane.b32.xlu0 %v547, 32
    %v549 = vpop.permute.xlu0 %548
    %v550 = vsel %vm123, %v549, 0
    %552 = vmatprep.subr.mxu0 0.0
    %553 = vmatpush1.msra.mxu0 %v117
    %554 = vmatprep.subr.mxu0 0.0
    %555 = vmatpush1.msra.mxu0 %v118
    %556 = vmatprep.subr.mxu0 0.0
    %557 = vmatpush1.msra.mxu0 %v119
    %558 = vmatprep.subr.mxu0 0.0
    %559 = vmatpush1.msra.mxu0 %v120
    %560 = vmatprep.subr.mxu0 0.0
    %561 = vmatpush1.msra.mxu0 0.0
    %562 = vmatprep.subr.mxu0 0.0
    %563 = vmatpush1.msra.mxu0 0.0
    %564 = vmatprep.subr.mxu0 0.0
    %565 = vmatpush1.msra.mxu0 0.0
    %566 = vmatprep.subr.mxu0 0.0
    %567 = vmatpush1.msra.mxu0 0.0
    %568 = vmatprep.subr.mxu0 0.0
    %569 = vmatpush1.msra.mxu0 0.0
    %570 = vmatprep.subr.mxu0 0.0
    %571 = vmatpush1.msra.mxu0 0.0
    %572 = vmatprep.subr.mxu0 0.0
    %573 = vmatpush1.msra.mxu0 0.0
    %574 = vmatprep.subr.mxu0 0.0
    %575 = vmatpush1.msra.mxu0 0.0
    %576 = vmatprep.subr.mxu0 0.0
    %577 = vmatpush1.msra.mxu0 0.0
    %578 = vmatprep.subr.mxu0 0.0
    %579 = vmatpush1.msra.mxu0 0.0
    %580 = vmatprep.subr.mxu0 0.0
    %581 = vmatpush1.msra.mxu0 0.0
    %582 = vmatprep.subr.mxu0 0.0
    %583 = vmatpush1.msra.mxu0 0.0
    %584 = vmatprep.subr.mxu0 0.0
    %585 = vmatpush1.msra.mxu0 0.0
    %586 = vmatprep.subr.mxu0 0.0
    %587 = vmatpush1.msra.mxu0 0.0
    %588 = vmatprep.subr.mxu0 0.0
    %589 = vmatpush1.msra.mxu0 0.0
    %590 = vmatprep.subr.mxu0 0.0
    %591 = vmatpush1.msra.mxu0 0.0
    %592 = vmatprep.subr.mxu0 0.0
    %593 = vmatpush1.msra.mxu0 0.0
    %594 = vmatprep.subr.mxu0 0.0
    %595 = vmatpush1.msra.mxu0 0.0
    %596 = vmatprep.subr.mxu0 0.0
    %597 = vmatpush1.msra.mxu0 0.0
    %598 = vmatprep.subr.mxu0 0.0
    %599 = vmatpush1.msra.mxu0 0.0
    %600 = vmatprep.subr.mxu0 0.0
    %601 = vmatpush1.msra.mxu0 0.0
    %602 = vmatprep.subr.mxu0 0.0
    %603 = vmatpush1.msra.mxu0 0.0
    %604 = vmatprep.subr.mxu0 0.0
    %605 = vmatpush1.msra.mxu0 0.0
    %606 = vmatprep.subr.mxu0 0.0
    %607 = vmatpush1.msra.mxu0 0.0
    %608 = vmatprep.subr.mxu0 0.0
    %609 = vmatpush1.msra.mxu0 0.0
    %610 = vmatprep.subr.mxu0 0.0
    %611 = vmatpush1.msra.mxu0 0.0
    %612 = vmatprep.subr.mxu0 0.0
    %613 = vmatpush1.msra.mxu0 0.0
    %614 = vmatprep.subr.mxu0 0.0
    %615 = vmatpush1.msra.mxu0 0.0
    %616 = vmatprep.mubr.f32.mxu0 0.0
    %617 = vmatmul.mubr.f32.gmra.mrb[0].mxu0 %v550
    %v618 = vpop.f32.mrb[0].mxu0
    %v619 = vadd.f32 0.0, %v618
    %v620 = vpop.f32.mrb[0].mxu0
    %621 = vdwg.mxu0
    %v623 = vrot.slane %v619, 4
    %v625 = vadd.f32 %v114, %v623
    %v626 = vxor.u32 %v625, 2147483648
    %v627 = vmul.f32 %v626, 1.442695
    %v628 = vpow.pop %v627
    %v629 = vadd.f32 %v628, 1.0
    %v630 = vrcp.pop %v629
    %v631 = vmul.f32 1.0, %v630
    %v632 = vtanh.pop %v625
    %v634 = vrot.slane %v539, 7
    %v636 = vmul.f32 %v631, %v634
    %638 = vrot.lane.b32.xlu0 %v632, 64
    %v639 = vpop.permute.xlu0 %638
    %v641 = vmul.f32 %v631, %v639
    %643 = vrot.lane.b32.xlu0 %v641, 32
    %v644 = vpop.permute.xlu0 %643
    %v646 = vadd.f32 %v636, %v644
    %v647 = vtanh.pop %v646
    %649 = vrot.lane.b32.xlu0 %v647, 64
    %v650 = vpop.permute.xlu0 %649
    %v652 = vmul.f32 %v631, %v650
    %v654 = vrot.slane %v652, 4
    %655 = vrot.lane.b32.xlu0 %v654, 32
    %v656 = vpop.permute.xlu0 %655
    %v657 = vsel %vm123, %v656, 0
    %659 = vmatprep.subr.mxu0 0.0
    %660 = vmatpush1.msra.mxu0 %v117
    %661 = vmatprep.subr.mxu0 0.0
    %662 = vmatpush1.msra.mxu0 %v118
    %663 = vmatprep.subr.mxu0 0.0
    %664 = vmatpush1.msra.mxu0 %v119
    %665 = vmatprep.subr.mxu0 0.0
    %666 = vmatpush1.msra.mxu0 %v120
    %667 = vmatprep.subr.mxu0 0.0
    %668 = vmatpush1.msra.mxu0 0.0
    %669 = vmatprep.subr.mxu0 0.0
    %670 = vmatpush1.msra.mxu0 0.0
    %671 = vmatprep.subr.mxu0 0.0
    %672 = vmatpush1.msra.mxu0 0.0
    %673 = vmatprep.subr.mxu0 0.0
    %674 = vmatpush1.msra.mxu0 0.0
    %675 = vmatprep.subr.mxu0 0.0
    %676 = vmatpush1.msra.mxu0 0.0
    %677 = vmatprep.subr.mxu0 0.0
    %678 = vmatpush1.msra.mxu0 0.0
    %679 = vmatprep.subr.mxu0 0.0
    %680 = vmatpush1.msra.mxu0 0.0
    %681 = vmatprep.subr.mxu0 0.0
    %682 = vmatpush1.msra.mxu0 0.0
    %683 = vmatprep.subr.mxu0 0.0
    %684 = vmatpush1.msra.mxu0 0.0
    %685 = vmatprep.subr.mxu0 0.0
    %686 = vmatpush1.msra.mxu0 0.0
    %687 = vmatprep.subr.mxu0 0.0
    %688 = vmatpush1.msra.mxu0 0.0
    %689 = vmatprep.subr.mxu0 0.0
    %690 = vmatpush1.msra.mxu0 0.0
    %691 = vmatprep.subr.mxu0 0.0
    %692 = vmatpush1.msra.mxu0 0.0
    %693 = vmatprep.subr.mxu0 0.0
    %694 = vmatpush1.msra.mxu0 0.0
    %695 = vmatprep.subr.mxu0 0.0
    %696 = vmatpush1.msra.mxu0 0.0
    %697 = vmatprep.subr.mxu0 0.0
    %698 = vmatpush1.msra.mxu0 0.0
    %699 = vmatprep.subr.mxu0 0.0
    %700 = vmatpush1.msra.mxu0 0.0
    %701 = vmatprep.subr.mxu0 0.0
    %702 = vmatpush1.msra.mxu0 0.0
    %703 = vmatprep.subr.mxu0 0.0
    %704 = vmatpush1.msra.mxu0 0.0
    %705 = vmatprep.subr.mxu0 0.0
    %706 = vmatpush1.msra.mxu0 0.0
    %707 = vmatprep.subr.mxu0 0.0
    %708 = vmatpush1.msra.mxu0 0.0
    %709 = vmatprep.subr.mxu0 0.0
    %710 = vmatpush1.msra.mxu0 0.0
    %711 = vmatprep.subr.mxu0 0.0
    %712 = vmatpush1.msra.mxu0 0.0
    %713 = vmatprep.subr.mxu0 0.0
    %714 = vmatpush1.msra.mxu0 0.0
    %715 = vmatprep.subr.mxu0 0.0
    %716 = vmatpush1.msra.mxu0 0.0
    %717 = vmatprep.subr.mxu0 0.0
    %718 = vmatpush1.msra.mxu0 0.0
    %719 = vmatprep.subr.mxu0 0.0
    %720 = vmatpush1.msra.mxu0 0.0
    %721 = vmatprep.subr.mxu0 0.0
    %722 = vmatpush1.msra.mxu0 0.0
    %723 = vmatprep.mubr.f32.mxu0 0.0
    %724 = vmatmul.mubr.f32.gmra.mrb[0].mxu0 %v657
    %v725 = vpop.f32.mrb[0].mxu0
    %v726 = vadd.f32 0.0, %v725
    %v727 = vpop.f32.mrb[0].mxu0
    %728 = vdwg.mxu0
    %v730 = vrot.slane %v726, 3
    %v732 = vadd.f32 %v114, %v730
    %v733 = vxor.u32 %v732, 2147483648
    %v734 = vmul.f32 %v733, 1.442695
    %v735 = vpow.pop %v734
    %v736 = vadd.f32 %v735, 1.0
    %v737 = vrcp.pop %v736
    %v738 = vmul.f32 1.0, %v737
    %v739 = vtanh.pop %v732
    %v741 = vrot.slane %v646, 7
    %v743 = vmul.f32 %v738, %v741
    %745 = vrot.lane.b32.xlu0 %v739, 64
    %v746 = vpop.permute.xlu0 %745
    %v748 = vmul.f32 %v738, %v746
    %750 = vrot.lane.b32.xlu0 %v748, 32
    %v751 = vpop.permute.xlu0 %750
    %v753 = vadd.f32 %v743, %v751
    %v754 = vtanh.pop %v753
    %756 = vrot.lane.b32.xlu0 %v754, 64
    %v757 = vpop.permute.xlu0 %756
    %v759 = vmul.f32 %v738, %v757
    %v761 = vrot.slane %v759, 5
    %762 = vrot.lane.b32.xlu0 %v761, 32
    %v763 = vpop.permute.xlu0 %762
    %v764 = vsel %vm123, %v763, 0
    %766 = vmatprep.subr.mxu0 0.0
    %767 = vmatpush1.msra.mxu0 %v117
    %768 = vmatprep.subr.mxu0 0.0
    %769 = vmatpush1.msra.mxu0 %v118
    %770 = vmatprep.subr.mxu0 0.0
    %771 = vmatpush1.msra.mxu0 %v119
    %772 = vmatprep.subr.mxu0 0.0
    %773 = vmatpush1.msra.mxu0 %v120
    %774 = vmatprep.subr.mxu0 0.0
    %775 = vmatpush1.msra.mxu0 0.0
    %776 = vmatprep.subr.mxu0 0.0
    %777 = vmatpush1.msra.mxu0 0.0
    %778 = vmatprep.subr.mxu0 0.0
    %779 = vmatpush1.msra.mxu0 0.0
    %780 = vmatprep.subr.mxu0 0.0
    %781 = vmatpush1.msra.mxu0 0.0
    %782 = vmatprep.subr.mxu0 0.0
    %783 = vmatpush1.msra.mxu0 0.0
    %784 = vmatprep.subr.mxu0 0.0
    %785 = vmatpush1.msra.mxu0 0.0
    %786 = vmatprep.subr.mxu0 0.0
    %787 = vmatpush1.msra.mxu0 0.0
    %788 = vmatprep.subr.mxu0 0.0
    %789 = vmatpush1.msra.mxu0 0.0
    %790 = vmatprep.subr.mxu0 0.0
    %791 = vmatpush1.msra.mxu0 0.0
    %792 = vmatprep.subr.mxu0 0.0
    %793 = vmatpush1.msra.mxu0 0.0
    %794 = vmatprep.subr.mxu0 0.0
    %795 = vmatpush1.msra.mxu0 0.0
    %796 = vmatprep.subr.mxu0 0.0
    %797 = vmatpush1.msra.mxu0 0.0
    %798 = vmatprep.subr.mxu0 0.0
    %799 = vmatpush1.msra.mxu0 0.0
    %800 = vmatprep.subr.mxu0 0.0
    %801 = vmatpush1.msra.mxu0 0.0
    %802 = vmatprep.subr.mxu0 0.0
    %803 = vmatpush1.msra.mxu0 0.0
    %804 = vmatprep.subr.mxu0 0.0
    %805 = vmatpush1.msra.mxu0 0.0
    %806 = vmatprep.subr.mxu0 0.0
    %807 = vmatpush1.msra.mxu0 0.0
    %808 = vmatprep.subr.mxu0 0.0
    %809 = vmatpush1.msra.mxu0 0.0
    %810 = vmatprep.subr.mxu0 0.0
    %811 = vmatpush1.msra.mxu0 0.0
    %812 = vmatprep.subr.mxu0 0.0
    %813 = vmatpush1.msra.mxu0 0.0
    %814 = vmatprep.subr.mxu0 0.0
    %815 = vmatpush1.msra.mxu0 0.0
    %816 = vmatprep.subr.mxu0 0.0
    %817 = vmatpush1.msra.mxu0 0.0
    %818 = vmatprep.subr.mxu0 0.0
    %819 = vmatpush1.msra.mxu0 0.0
    %820 = vmatprep.subr.mxu0 0.0
    %821 = vmatpush1.msra.mxu0 0.0
    %822 = vmatprep.subr.mxu0 0.0
    %823 = vmatpush1.msra.mxu0 0.0
    %824 = vmatprep.subr.mxu0 0.0
    %825 = vmatpush1.msra.mxu0 0.0
    %826 = vmatprep.subr.mxu0 0.0
    %827 = vmatpush1.msra.mxu0 0.0
    %828 = vmatprep.subr.mxu0 0.0
    %829 = vmatpush1.msra.mxu0 0.0
    %830 = vmatprep.mubr.f32.mxu0 0.0
    %831 = vmatmul.mubr.f32.gmra.mrb[0].mxu0 %v764
    %v832 = vpop.f32.mrb[0].mxu0
    %v833 = vadd.f32 0.0, %v832
    %v834 = vpop.f32.mrb[0].mxu0
    %835 = vdwg.mxu0
    %v837 = vrot.slane %v833, 2
    %v839 = vadd.f32 %v114, %v837
    %v840 = vxor.u32 %v839, 2147483648
    %v841 = vmul.f32 %v840, 1.442695
    %v842 = vpow.pop %v841
    %v843 = vadd.f32 %v842, 1.0
    %v844 = vrcp.pop %v843
    %v845 = vmul.f32 1.0, %v844
    %v846 = vtanh.pop %v839
    %v848 = vrot.slane %v753, 7
    %v850 = vmul.f32 %v845, %v848
    %852 = vrot.lane.b32.xlu0 %v846, 64
    %v853 = vpop.permute.xlu0 %852
    %v855 = vmul.f32 %v845, %v853
    %857 = vrot.lane.b32.xlu0 %v855, 32
    %v858 = vpop.permute.xlu0 %857
    %v860 = vadd.f32 %v850, %v858
    %v861 = vtanh.pop %v860
    %863 = vrot.lane.b32.xlu0 %v861, 64
    %v864 = vpop.permute.xlu0 %863
    %v866 = vmul.f32 %v845, %v864
    %v868 = vrot.slane %v866, 6
    %869 = vrot.lane.b32.xlu0 %v868, 32
    %v870 = vpop.permute.xlu0 %869
    %v871 = vsel %vm123, %v870, 0
    %873 = vmatprep.subr.mxu0 0.0
    %874 = vmatpush1.msra.mxu0 %v117
    %875 = vmatprep.subr.mxu0 0.0
    %876 = vmatpush1.msra.mxu0 %v118
    %877 = vmatprep.subr.mxu0 0.0
    %878 = vmatpush1.msra.mxu0 %v119
    %879 = vmatprep.subr.mxu0 0.0
    %880 = vmatpush1.msra.mxu0 %v120
    %881 = vmatprep.subr.mxu0 0.0
    %882 = vmatpush1.msra.mxu0 0.0
    %883 = vmatprep.subr.mxu0 0.0
    %884 = vmatpush1.msra.mxu0 0.0
    %885 = vmatprep.subr.mxu0 0.0
    %886 = vmatpush1.msra.mxu0 0.0
    %887 = vmatprep.subr.mxu0 0.0
    %888 = vmatpush1.msra.mxu0 0.0
    %889 = vmatprep.subr.mxu0 0.0
    %890 = vmatpush1.msra.mxu0 0.0
    %891 = vmatprep.subr.mxu0 0.0
    %892 = vmatpush1.msra.mxu0 0.0
    %893 = vmatprep.subr.mxu0 0.0
    %894 = vmatpush1.msra.mxu0 0.0
    %895 = vmatprep.subr.mxu0 0.0
    %896 = vmatpush1.msra.mxu0 0.0
    %897 = vmatprep.subr.mxu0 0.0
    %898 = vmatpush1.msra.mxu0 0.0
    %899 = vmatprep.subr.mxu0 0.0
    %900 = vmatpush1.msra.mxu0 0.0
    %901 = vmatprep.subr.mxu0 0.0
    %902 = vmatpush1.msra.mxu0 0.0
    %903 = vmatprep.subr.mxu0 0.0
    %904 = vmatpush1.msra.mxu0 0.0
    %905 = vmatprep.subr.mxu0 0.0
    %906 = vmatpush1.msra.mxu0 0.0
    %907 = vmatprep.subr.mxu0 0.0
    %908 = vmatpush1.msra.mxu0 0.0
    %909 = vmatprep.subr.mxu0 0.0
    %910 = vmatpush1.msra.mxu0 0.0
    %911 = vmatprep.subr.mxu0 0.0
    %912 = vmatpush1.msra.mxu0 0.0
    %913 = vmatprep.subr.mxu0 0.0
    %914 = vmatpush1.msra.mxu0 0.0
    %915 = vmatprep.subr.mxu0 0.0
    %916 = vmatpush1.msra.mxu0 0.0
    %917 = vmatprep.subr.mxu0 0.0
    %918 = vmatpush1.msra.mxu0 0.0
    %919 = vmatprep.subr.mxu0 0.0
    %920 = vmatpush1.msra.mxu0 0.0
    %921 = vmatprep.subr.mxu0 0.0
    %922 = vmatpush1.msra.mxu0 0.0
    %923 = vmatprep.subr.mxu0 0.0
    %924 = vmatpush1.msra.mxu0 0.0
    %925 = vmatprep.subr.mxu0 0.0
    %926 = vmatpush1.msra.mxu0 0.0
    %927 = vmatprep.subr.mxu0 0.0
    %928 = vmatpush1.msra.mxu0 0.0
    %929 = vmatprep.subr.mxu0 0.0
    %930 = vmatpush1.msra.mxu0 0.0
    %931 = vmatprep.subr.mxu0 0.0
    %932 = vmatpush1.msra.mxu0 0.0
    %933 = vmatprep.subr.mxu0 0.0
    %934 = vmatpush1.msra.mxu0 0.0
    %935 = vmatprep.subr.mxu0 0.0
    %936 = vmatpush1.msra.mxu0 0.0
    %937 = vmatprep.mubr.f32.mxu0 0.0
    %938 = vmatmul.mubr.f32.gmra.mrb[0].mxu0 %v871
    %v939 = vpop.f32.mrb[0].mxu0
    %v940 = vadd.f32 0.0, %v939
    %v941 = vpop.f32.mrb[0].mxu0
    %942 = vdwg.mxu0
    %v944 = vrot.slane %v940, 1
    %v946 = vadd.f32 %v114, %v944
    %v947 = vxor.u32 %v946, 2147483648
    %v948 = vmul.f32 %v947, 1.442695
    %v949 = vpow.pop %v948
    %v950 = vadd.f32 %v949, 1.0
    %v951 = vrcp.pop %v950
    %v952 = vmul.f32 1.0, %v951
    %v953 = vtanh.pop %v946
    %v955 = vrot.slane %v860, 7
    %v957 = vmul.f32 %v952, %v955
    %959 = vrot.lane.b32.xlu0 %v953, 64
    %v960 = vpop.permute.xlu0 %959
    %v962 = vmul.f32 %v952, %v960
    %964 = vrot.lane.b32.xlu0 %v962, 32
    %v965 = vpop.permute.xlu0 %964
    %v967 = vadd.f32 %v957, %v965
    %v968 = vtanh.pop %v967
    %970 = vrot.lane.b32.xlu0 %v968, 64
    %v971 = vpop.permute.xlu0 %970
    %v973 = vmul.f32 %v952, %v971
    %975 = vrot.lane.b32.xlu0 %v973, 32
    %v976 = vpop.permute.xlu0 %975
    %vm978 = vcmask 261127
    %979 = vst.msk [vmem:[#allocation4 - $0x7] sm:$0x80] %vm978, %v976
    %981 = vrot.lane.b32.xlu0 %v967, 96
    %v982 = vpop.permute.xlu0 %981
    %984 = vst.msk [vmem:[#allocation4 - $0x6] sm:$0x80] %vm978, %v982
    %v985 = vld [vmem:[%s5] sm:$0xff]
    %v986 = vld [vmem:[%s5 + $0x8] sm:$0xff]
    %v987 = vld [vmem:[%s5 + $0x10] sm:$0xff]
    %v988 = vld [vmem:[%s5 + $0x18] sm:$0xff]
    %v989 = vld [vmem:[%s6] sm:$0x1]
    %v990 = vrot.slane %v973, 7
    %991 = vrot.lane.b32.xlu0 %v990, 32
    %v992 = vpop.permute.xlu0 %991
    %v993 = vsel %vm123, %v992, 0
    %995 = vmatprep.subr.mxu0 0.0
    %996 = vmatpush1.msra.mxu0 %v985
    %997 = vmatprep.subr.mxu0 0.0
    %998 = vmatpush1.msra.mxu0 %v986
    %999 = vmatprep.subr.mxu0 0.0
    %1000 = vmatpush1.msra.mxu0 %v987
    %1001 = vmatprep.subr.mxu0 0.0
    %1002 = vmatpush1.msra.mxu0 %v988
    %1003 = vmatprep.subr.mxu0 0.0
    %1004 = vmatpush1.msra.mxu0 0.0
    %1005 = vmatprep.subr.mxu0 0.0
    %1006 = vmatpush1.msra.mxu0 0.0
    %1007 = vmatprep.subr.mxu0 0.0
    %1008 = vmatpush1.msra.mxu0 0.0
    %1009 = vmatprep.subr.mxu0 0.0
    %1010 = vmatpush1.msra.mxu0 0.0
    %1011 = vmatprep.subr.mxu0 0.0
    %1012 = vmatpush1.msra.mxu0 0.0
    %1013 = vmatprep.subr.mxu0 0.0
    %1014 = vmatpush1.msra.mxu0 0.0
    %1015 = vmatprep.subr.mxu0 0.0
    %1016 = vmatpush1.msra.mxu0 0.0
    %1017 = vmatprep.subr.mxu0 0.0
    %1018 = vmatpush1.msra.mxu0 0.0
    %1019 = vmatprep.subr.mxu0 0.0
    %1020 = vmatpush1.msra.mxu0 0.0
    %1021 = vmatprep.subr.mxu0 0.0
    %1022 = vmatpush1.msra.mxu0 0.0
    %1023 = vmatprep.subr.mxu0 0.0
    %1024 = vmatpush1.msra.mxu0 0.0
    %1025 = vmatprep.subr.mxu0 0.0
    %1026 = vmatpush1.msra.mxu0 0.0
    %1027 = vmatprep.subr.mxu0 0.0
    %1028 = vmatpush1.msra.mxu0 0.0
    %1029 = vmatprep.subr.mxu0 0.0
    %1030 = vmatpush1.msra.mxu0 0.0
    %1031 = vmatprep.subr.mxu0 0.0
    %1032 = vmatpush1.msra.mxu0 0.0
    %1033 = vmatprep.subr.mxu0 0.0
    %1034 = vmatpush1.msra.mxu0 0.0
    %1035 = vmatprep.subr.mxu0 0.0
    %1036 = vmatpush1.msra.mxu0 0.0
    %1037 = vmatprep.subr.mxu0 0.0
    %1038 = vmatpush1.msra.mxu0 0.0
    %1039 = vmatprep.subr.mxu0 0.0
    %1040 = vmatpush1.msra.mxu0 0.0
    %1041 = vmatprep.subr.mxu0 0.0
    %1042 = vmatpush1.msra.mxu0 0.0
    %1043 = vmatprep.subr.mxu0 0.0
    %1044 = vmatpush1.msra.mxu0 0.0
    %1045 = vmatprep.subr.mxu0 0.0
    %1046 = vmatpush1.msra.mxu0 0.0
    %1047 = vmatprep.subr.mxu0 0.0
    %1048 = vmatpush1.msra.mxu0 0.0
    %1049 = vmatprep.subr.mxu0 0.0
    %1050 = vmatpush1.msra.mxu0 0.0
    %1051 = vmatprep.subr.mxu0 0.0
    %1052 = vmatpush1.msra.mxu0 0.0
    %1053 = vmatprep.subr.mxu0 0.0
    %1054 = vmatpush1.msra.mxu0 0.0
    %1055 = vmatprep.subr.mxu0 0.0
    %1056 = vmatpush1.msra.mxu0 0.0
    %1057 = vmatprep.subr.mxu0 0.0
    %1058 = vmatpush1.msra.mxu0 0.0
    %1059 = vmatprep.mubr.f32.mxu0 0.0
    %1060 = vmatmul.mubr.f32.gmra.mrb[0].mxu0 %v993
    %v1061 = vpop.f32.mrb[0].mxu0
    %v1062 = vadd.f32 %v989, %v1061
    %v1063 = vpop.f32.mrb[0].mxu0
    %1064 = vdwg.mxu0
    %vm1065 = vcmask 24576
    %1066 = vst.msk [vmem:[#allocation2] sm:$0x1] %vm1065, %v1062
    // Predicated region
    $region30: #{tpu_custom_call.1} parent=1 // pred_check
      _
    $region31: #{tpu_custom_call.1} parent=1 // pred_check_branch
      %1068 = sbr.rel (0) target = $region33
    $region32: #{tpu_custom_call.1} parent=1 // pred_region
      %s1070 = ssub.s32 16, 16
      %1071 = vsyncadd [#allocation3], %s1070
      %s1073 = sshll.u32 [#allocation2], 4
      %s1074 = int_to_ptr.vmem [resolvable:$true] %s1073
      %1076 = dma.vmem_to_hbm [thread:$0]  %s1074, 16, %s7, [#allocation3]
    $region33: #{tpu_custom_call.1} parent=1 // pred_fallthru
      _
    // Predicated region
    $region34: #{tpu_custom_call.1} parent=1 // pred_check
      _
    $region35: #{tpu_custom_call.1} parent=1 // pred_check_branch
      %1078 = sbr.rel (0) target = $region37
    $region36: #{tpu_custom_call.1} parent=1 // pred_region
      %s1080 = ssub.s32 32, 32
      %1081 = vsyncadd [#allocation5], %s1080
      %s1083 = sshll.u32 [#allocation4], 4
      %s1084 = int_to_ptr.vmem [resolvable:$true] %s1083
      %1086 = dma.vmem_to_hbm [thread:$0]  %s1084, 32, %s8, [#allocation5]
    $region37: #{tpu_custom_call.1} parent=1 // pred_fallthru
      _
    // Predicated region
    $region38: #{tpu_custom_call.1} parent=1 // pred_check
      _
    $region39: #{tpu_custom_call.1} parent=1 // pred_check_branch
      %1088 = sbr.rel (0) target = $region41
    $region40: #{tpu_custom_call.1} parent=1 // pred_region
      %1089 = dma.done [#allocation3], 16
    $region41: #{tpu_custom_call.1} parent=1 // pred_fallthru
      _
    // Predicated region
    $region42: #{tpu_custom_call.1} parent=1 // pred_check
      _
    $region43: #{tpu_custom_call.1} parent=1 // pred_check_branch
      %1091 = sbr.rel (0) target = $region45
    $region44: #{tpu_custom_call.1} parent=1 // pred_region
      %1092 = dma.done [#allocation5], 32
    $region45: #{tpu_custom_call.1} parent=1 // pred_fallthru
      _
    %1093 = vsyncpa [#allocation3], 1
    %1094 = vsyncpa [#allocation5], 1

</llo_original>
